<compile_context>
chip_gen: v5e
topology: v5e:2x2
jax: 0.10.0
libtpu: 0.0.40
codegen_flags: <defaults>
</compile_context>

<pallas_src>
import math
import functools

import jax
import jax.numpy as jnp
from jax.experimental import pallas as pl
from jax.experimental.pallas import tpu as pltpu


# ---------------------------------------------------------------------------
# Fused kernel: QKV projection + per-head SDPA + output projection, per batch.
# ---------------------------------------------------------------------------

def _general_attn_kernel(x_ref, wqkv_ref, bqkv_ref, wo_ref, bo_ref, o_ref, *, num_heads):
    x = x_ref[0]                              # (N, E) for the current batch element
    N, E = x.shape
    H = num_heads
    D = E // H
    scale = 1.0 / math.sqrt(D)

    # Fused Q/K/V projection: one MXU matmul, lane-dense 3E output.
    qkv = (jnp.dot(x, wqkv_ref[...], preferred_element_type=jnp.float32)
           + bqkv_ref[...])                   # (N, 3E) f32
    q = qkv[:, :E] * scale                    # pre-scale Q by 1/sqrt(D)
    k = qkv[:, E:2 * E]
    v = qkv[:, 2 * E:]

    wo = wo_ref[...]                          # (E, E), resident in VMEM
    out = bo_ref[...]                         # (1, E) -> broadcasts to (N, E)

    # Per-head attention; head merge + out-projection fused as an accumulation.
    # Slices are at multiples of D=8, i.e. aligned to the (8,128) vreg tiling.
    for h in range(H):
        sl = slice(h * D, (h + 1) * D)
        qh, kh, vh = q[:, sl], k[:, sl], v[:, sl]

        # scores = qh @ kh^T, contracting dim 1 of both (no transpose materialized)
        s = jax.lax.dot_general(qh, kh, (((1,), (1,)), ((), ())),
                                preferred_element_type=jnp.float32)      # (N, N)

        m = jnp.max(s, axis=-1, keepdims=True)
        p = jnp.exp(s - m)                                               # unnormalized
        denom = jnp.sum(p, axis=-1, keepdims=True)

        oh = jnp.dot(p, vh, preferred_element_type=jnp.float32)          # (N, D)
        oh = oh * pl.reciprocal(denom, approx=True)                      # EUP, ~free

        out = out + jnp.dot(oh, wo[sl, :], preferred_element_type=jnp.float32)

    o_ref[0] = out.astype(o_ref.dtype)


# ---------------------------------------------------------------------------
# Wrapper
# ---------------------------------------------------------------------------

def general_attn_forward(x, params, num_heads):
    """Replicates GeneralAttn.forward(batch) with mask=None, dropout_p=0.

    x: (B, N, E) -> (B, N, E)
    """
    B, N, E = x.shape
    wqkv = params["wqkv_t"]                     # (E, 3E)  (= [Wq^T | Wk^T | Wv^T])
    bqkv = params["bqkv"].reshape(1, 3 * E)
    wo = params["wo_t"]                         # (E, E)
    bo = params["bo"].reshape(1, E)

    kernel = functools.partial(_general_attn_kernel, num_heads=num_heads)
    return pl.pallas_call(
        kernel,
        grid=(B,),
        in_specs=[
            pl.BlockSpec((1, N, E), lambda b: (b, 0, 0)),       # x: one batch per step
            pl.BlockSpec((E, 3 * E), lambda b: (0, 0)),         # Wqkv: resident
            pl.BlockSpec((1, 3 * E), lambda b: (0, 0)),         # bqkv: resident
            pl.BlockSpec((E, E), lambda b: (0, 0)),             # Wo:   resident
            pl.BlockSpec((1, E), lambda b: (0, 0)),             # bo:   resident
        ],
        out_specs=pl.BlockSpec((1, N, E), lambda b: (b, 0, 0)),
        out_shape=jax.ShapeDtypeStruct((B, N, E), x.dtype),
        compiler_params=pltpu.CompilerParams(
            dimension_semantics=("parallel",)),                 # batch axis -> both TCs
    )(x, wqkv, bqkv, wo, bo)


# ---------------------------------------------------------------------------
# Reference (plain JAX) for verification
# ---------------------------------------------------------------------------

def reference_forward(x, params, num_heads):
    B, N, E = x.shape
    H = num_heads
    D = E // H
    qkv = x @ params["wqkv_t"] + params["bqkv"]                 # (B, N, 3E)
    q, k, v = jnp.split(qkv, 3, axis=-1)

    def heads(t):
        return t.reshape(B, N, H, D).transpose(0, 2, 1, 3)      # (B, H, N, D)

    qh, kh, vh = heads(q), heads(k), heads(v)
    s = jnp.einsum("bhnd,bhmd->bhnm", qh, kh) / math.sqrt(D)
    w = jax.nn.softmax(s, axis=-1)
    o = jnp.einsum("bhnm,bhmd->bhnd", w, vh)
    o = o.transpose(0, 2, 1, 3).reshape(B, N, E)
    return o @ params["wo_t"] + params["bo"]


# ---------------------------------------------------------------------------
# Parameter init (deterministic, nn.Linear-style uniform, torch layout)
# ---------------------------------------------------------------------------

def init_params(key, embed_dim):
    bound = 1.0 / math.sqrt(embed_dim)
    keys = jax.random.split(key, 8)

    def lin(kw, kb):
        # torch Linear weight is (out, in); store transposed (in, out) for x @ W^T.
        w = jax.random.uniform(kw, (embed_dim, embed_dim), jnp.float32, -bound, bound)
        b = jax.random.uniform(kb, (embed_dim,), jnp.float32, -bound, bound)
        return w.T, b

    wq_t, bq = lin(keys[0], keys[1])
    wk_t, bk = lin(keys[2], keys[3])
    wv_t, bv = lin(keys[4], keys[5])
    wo_t, bo = lin(keys[6], keys[7])
    return {
        "wqkv_t": jnp.concatenate([wq_t, wk_t, wv_t], axis=1),  # (E, 3E)
        "bqkv": jnp.concatenate([bq, bk, bv], axis=0),          # (3E,)
        "wo_t": wo_t,                                           # (E, E)
        "bo": bo,                                               # (E,)
    }


# ---------------------------------------------------------------------------
# Main
# ---------------------------------------------------------------------------

if __name__ == "__main__":
    B, N, EMBED_DIM, NUM_HEADS = 2, 8, 32, 4   # head_dim = 8

    key = jax.random.PRNGKey(0)
    k_x, k_p = jax.random.split(key)
    x = jax.random.normal(k_x, (B, N, EMBED_DIM), dtype=jnp.float32)
    params = init_params(k_p, EMBED_DIM)

    fwd = jax.jit(functools.partial(general_attn_forward, num_heads=NUM_HEADS))
    out = jax.block_until_ready(fwd(x, params))

    ref = reference_forward(x, params, NUM_HEADS)
    assert out.shape == (B, N, EMBED_DIM)
    max_err = float(jnp.max(jnp.abs(out - ref)))
    assert max_err < 2e-3, f"mismatch vs reference: max abs err = {max_err}"

    print("KERNEL_OK")
</pallas_src>

<mosaic_0001>
module attributes {stable_mosaic.version = 11 : i64} {
  func.func @_general_attn_kernel(%arg0: i32, %arg1: memref<1x8x32xf32, #tpu.memory_space<vmem>>, %arg2: memref<32x96xf32, #tpu.memory_space<vmem>>, %arg3: memref<1x96xf32, #tpu.memory_space<vmem>>, %arg4: memref<32x32xf32, #tpu.memory_space<vmem>>, %arg5: memref<1x32xf32, #tpu.memory_space<vmem>>, %arg6: memref<1x8x32xf32, #tpu.memory_space<vmem>>) attributes {dimension_semantics = [#tpu.dimension_semantics<parallel>], iteration_bounds = array<i64: 2>, scalar_prefetch = 0 : i64, scratch_operands = 0 : i64, tpu.core_type = #tpu.core_type<tc>, window_params = [{transform_indices = @transform_0, window_bounds = array<i64: 1, 8, 32>}, {pipeline_mode = #tpu.pipeline_mode<synchronous>, transform_indices = @transform_1, window_bounds = array<i64: 32, 96>}, {pipeline_mode = #tpu.pipeline_mode<synchronous>, transform_indices = @transform_2, window_bounds = array<i64: 1, 96>}, {pipeline_mode = #tpu.pipeline_mode<synchronous>, transform_indices = @transform_3, window_bounds = array<i64: 32, 32>}, {pipeline_mode = #tpu.pipeline_mode<synchronous>, transform_indices = @transform_4, window_bounds = array<i64: 1, 32>}, {transform_indices = @transform_5, window_bounds = array<i64: 1, 8, 32>}]} {
    %c0 = arith.constant 0 : index
    %c0_0 = arith.constant 0 : index
    %c0_1 = arith.constant 0 : index
    %0 = vector.load %arg1[%c0, %c0_0, %c0_1] : memref<1x8x32xf32, #tpu.memory_space<vmem>>, vector<1x8x32xf32>
    %1 = vector.shape_cast %0 : vector<1x8x32xf32> to vector<8x32xf32>
    %c0_2 = arith.constant 0 : index
    %c0_3 = arith.constant 0 : index
    %2 = vector.load %arg2[%c0_2, %c0_3] : memref<32x96xf32, #tpu.memory_space<vmem>>, vector<32x96xf32>
    %cst = arith.constant dense<0.000000e+00> : vector<8x96xf32>
    %3 = tpu.matmul %1, %2, %cst {dimension_numbers = #tpu.dot_dimension_numbers<[1], [0], [0], [1], [0, 0, 1, 1], [], []>} : vector<8x32xf32>, vector<32x96xf32>, vector<8x96xf32> -> vector<8x96xf32>
    %c0_4 = arith.constant 0 : index
    %c0_5 = arith.constant 0 : index
    %4 = vector.load %arg3[%c0_4, %c0_5] : memref<1x96xf32, #tpu.memory_space<vmem>>, vector<1x96xf32>
    %5 = vector.broadcast %4 : vector<1x96xf32> to vector<8x96xf32>
    %6 = arith.addf %3, %5 : vector<8x96xf32>
    %7 = vector.extract_strided_slice %6 {offsets = [0, 0], sizes = [8, 32], strides = [1, 1]} : vector<8x96xf32> to vector<8x32xf32>
    %cst_6 = arith.constant 0.353553385 : f32
    %8 = vector.broadcast %cst_6 : f32 to vector<8x32xf32>
    %9 = arith.mulf %7, %8 : vector<8x32xf32>
    %10 = vector.extract_strided_slice %6 {offsets = [0, 32], sizes = [8, 32], strides = [1, 1]} : vector<8x96xf32> to vector<8x32xf32>
    %11 = vector.extract_strided_slice %6 {offsets = [0, 64], sizes = [8, 32], strides = [1, 1]} : vector<8x96xf32> to vector<8x32xf32>
    %c0_7 = arith.constant 0 : index
    %c0_8 = arith.constant 0 : index
    %12 = vector.load %arg4[%c0_7, %c0_8] : memref<32x32xf32, #tpu.memory_space<vmem>>, vector<32x32xf32>
    %c0_9 = arith.constant 0 : index
    %c0_10 = arith.constant 0 : index
    %13 = vector.load %arg5[%c0_9, %c0_10] : memref<1x32xf32, #tpu.memory_space<vmem>>, vector<1x32xf32>
    %14 = vector.extract_strided_slice %9 {offsets = [0, 0], sizes = [8, 8], strides = [1, 1]} : vector<8x32xf32> to vector<8x8xf32>
    %15 = vector.extract_strided_slice %10 {offsets = [0, 0], sizes = [8, 8], strides = [1, 1]} : vector<8x32xf32> to vector<8x8xf32>
    %16 = vector.extract_strided_slice %11 {offsets = [0, 0], sizes = [8, 8], strides = [1, 1]} : vector<8x32xf32> to vector<8x8xf32>
    %cst_11 = arith.constant dense<0.000000e+00> : vector<8x8xf32>
    %17 = tpu.matmul %14, %15, %cst_11 {dimension_numbers = #tpu.dot_dimension_numbers<[1], [1], [0], [0], [0, 0, 1, 0], [], []>} : vector<8x8xf32>, vector<8x8xf32>, vector<8x8xf32> -> vector<8x8xf32>
    %cst_12 = arith.constant dense<0xFF800000> : vector<8xf32>
    %18 = vector.multi_reduction <maximumf>, %17, %cst_12 [1] : vector<8x8xf32> to vector<8xf32>
    %19 = vector.shape_cast %18 : vector<8xf32> to vector<8x1xf32>
    %20 = vector.broadcast %19 : vector<8x1xf32> to vector<8x8xf32>
    %21 = arith.subf %17, %20 : vector<8x8xf32>
    %22 = math.exp %21 : vector<8x8xf32>
    %cst_13 = arith.constant dense<0.000000e+00> : vector<8xf32>
    %23 = vector.multi_reduction <add>, %22, %cst_13 [1] : vector<8x8xf32> to vector<8xf32>
    %24 = vector.shape_cast %23 : vector<8xf32> to vector<8x1xf32>
    %cst_14 = arith.constant dense<0.000000e+00> : vector<8x8xf32>
    %25 = tpu.matmul %22, %16, %cst_14 {dimension_numbers = #tpu.dot_dimension_numbers<[1], [0], [0], [1], [0, 0, 1, 1], [], []>} : vector<8x8xf32>, vector<8x8xf32>, vector<8x8xf32> -> vector<8x8xf32>
    %26 = tpu.reciprocal %24 {approx = true} : vector<8x1xf32> -> vector<8x1xf32>
    %27 = vector.broadcast %26 : vector<8x1xf32> to vector<8x8xf32>
    %28 = arith.mulf %25, %27 : vector<8x8xf32>
    %29 = vector.extract_strided_slice %12 {offsets = [0, 0], sizes = [8, 32], strides = [1, 1]} : vector<32x32xf32> to vector<8x32xf32>
    %cst_15 = arith.constant dense<0.000000e+00> : vector<8x32xf32>
    %30 = tpu.matmul %28, %29, %cst_15 {dimension_numbers = #tpu.dot_dimension_numbers<[1], [0], [0], [1], [0, 0, 1, 1], [], []>} : vector<8x8xf32>, vector<8x32xf32>, vector<8x32xf32> -> vector<8x32xf32>
    %31 = vector.broadcast %13 : vector<1x32xf32> to vector<8x32xf32>
    %32 = arith.addf %31, %30 : vector<8x32xf32>
    %33 = vector.extract_strided_slice %9 {offsets = [0, 8], sizes = [8, 8], strides = [1, 1]} : vector<8x32xf32> to vector<8x8xf32>
    %34 = vector.extract_strided_slice %10 {offsets = [0, 8], sizes = [8, 8], strides = [1, 1]} : vector<8x32xf32> to vector<8x8xf32>
    %35 = vector.extract_strided_slice %11 {offsets = [0, 8], sizes = [8, 8], strides = [1, 1]} : vector<8x32xf32> to vector<8x8xf32>
    %cst_16 = arith.constant dense<0.000000e+00> : vector<8x8xf32>
    %36 = tpu.matmul %33, %34, %cst_16 {dimension_numbers = #tpu.dot_dimension_numbers<[1], [1], [0], [0], [0, 0, 1, 0], [], []>} : vector<8x8xf32>, vector<8x8xf32>, vector<8x8xf32> -> vector<8x8xf32>
    %cst_17 = arith.constant dense<0xFF800000> : vector<8xf32>
    %37 = vector.multi_reduction <maximumf>, %36, %cst_17 [1] : vector<8x8xf32> to vector<8xf32>
    %38 = vector.shape_cast %37 : vector<8xf32> to vector<8x1xf32>
    %39 = vector.broadcast %38 : vector<8x1xf32> to vector<8x8xf32>
    %40 = arith.subf %36, %39 : vector<8x8xf32>
    %41 = math.exp %40 : vector<8x8xf32>
    %cst_18 = arith.constant dense<0.000000e+00> : vector<8xf32>
    %42 = vector.multi_reduction <add>, %41, %cst_18 [1] : vector<8x8xf32> to vector<8xf32>
    %43 = vector.shape_cast %42 : vector<8xf32> to vector<8x1xf32>
    %cst_19 = arith.constant dense<0.000000e+00> : vector<8x8xf32>
    %44 = tpu.matmul %41, %35, %cst_19 {dimension_numbers = #tpu.dot_dimension_numbers<[1], [0], [0], [1], [0, 0, 1, 1], [], []>} : vector<8x8xf32>, vector<8x8xf32>, vector<8x8xf32> -> vector<8x8xf32>
    %45 = tpu.reciprocal %43 {approx = true} : vector<8x1xf32> -> vector<8x1xf32>
    %46 = vector.broadcast %45 : vector<8x1xf32> to vector<8x8xf32>
    %47 = arith.mulf %44, %46 : vector<8x8xf32>
    %48 = vector.extract_strided_slice %12 {offsets = [8, 0], sizes = [8, 32], strides = [1, 1]} : vector<32x32xf32> to vector<8x32xf32>
    %cst_20 = arith.constant dense<0.000000e+00> : vector<8x32xf32>
    %49 = tpu.matmul %47, %48, %cst_20 {dimension_numbers = #tpu.dot_dimension_numbers<[1], [0], [0], [1], [0, 0, 1, 1], [], []>} : vector<8x8xf32>, vector<8x32xf32>, vector<8x32xf32> -> vector<8x32xf32>
    %50 = arith.addf %32, %49 : vector<8x32xf32>
    %51 = vector.extract_strided_slice %9 {offsets = [0, 16], sizes = [8, 8], strides = [1, 1]} : vector<8x32xf32> to vector<8x8xf32>
    %52 = vector.extract_strided_slice %10 {offsets = [0, 16], sizes = [8, 8], strides = [1, 1]} : vector<8x32xf32> to vector<8x8xf32>
    %53 = vector.extract_strided_slice %11 {offsets = [0, 16], sizes = [8, 8], strides = [1, 1]} : vector<8x32xf32> to vector<8x8xf32>
    %cst_21 = arith.constant dense<0.000000e+00> : vector<8x8xf32>
    %54 = tpu.matmul %51, %52, %cst_21 {dimension_numbers = #tpu.dot_dimension_numbers<[1], [1], [0], [0], [0, 0, 1, 0], [], []>} : vector<8x8xf32>, vector<8x8xf32>, vector<8x8xf32> -> vector<8x8xf32>
    %cst_22 = arith.constant dense<0xFF800000> : vector<8xf32>
    %55 = vector.multi_reduction <maximumf>, %54, %cst_22 [1] : vector<8x8xf32> to vector<8xf32>
    %56 = vector.shape_cast %55 : vector<8xf32> to vector<8x1xf32>
    %57 = vector.broadcast %56 : vector<8x1xf32> to vector<8x8xf32>
    %58 = arith.subf %54, %57 : vector<8x8xf32>
    %59 = math.exp %58 : vector<8x8xf32>
    %cst_23 = arith.constant dense<0.000000e+00> : vector<8xf32>
    %60 = vector.multi_reduction <add>, %59, %cst_23 [1] : vector<8x8xf32> to vector<8xf32>
    %61 = vector.shape_cast %60 : vector<8xf32> to vector<8x1xf32>
    %cst_24 = arith.constant dense<0.000000e+00> : vector<8x8xf32>
    %62 = tpu.matmul %59, %53, %cst_24 {dimension_numbers = #tpu.dot_dimension_numbers<[1], [0], [0], [1], [0, 0, 1, 1], [], []>} : vector<8x8xf32>, vector<8x8xf32>, vector<8x8xf32> -> vector<8x8xf32>
    %63 = tpu.reciprocal %61 {approx = true} : vector<8x1xf32> -> vector<8x1xf32>
    %64 = vector.broadcast %63 : vector<8x1xf32> to vector<8x8xf32>
    %65 = arith.mulf %62, %64 : vector<8x8xf32>
    %66 = vector.extract_strided_slice %12 {offsets = [16, 0], sizes = [8, 32], strides = [1, 1]} : vector<32x32xf32> to vector<8x32xf32>
    %cst_25 = arith.constant dense<0.000000e+00> : vector<8x32xf32>
    %67 = tpu.matmul %65, %66, %cst_25 {dimension_numbers = #tpu.dot_dimension_numbers<[1], [0], [0], [1], [0, 0, 1, 1], [], []>} : vector<8x8xf32>, vector<8x32xf32>, vector<8x32xf32> -> vector<8x32xf32>
    %68 = arith.addf %50, %67 : vector<8x32xf32>
    %69 = vector.extract_strided_slice %9 {offsets = [0, 24], sizes = [8, 8], strides = [1, 1]} : vector<8x32xf32> to vector<8x8xf32>
    %70 = vector.extract_strided_slice %10 {offsets = [0, 24], sizes = [8, 8], strides = [1, 1]} : vector<8x32xf32> to vector<8x8xf32>
    %71 = vector.extract_strided_slice %11 {offsets = [0, 24], sizes = [8, 8], strides = [1, 1]} : vector<8x32xf32> to vector<8x8xf32>
    %cst_26 = arith.constant dense<0.000000e+00> : vector<8x8xf32>
    %72 = tpu.matmul %69, %70, %cst_26 {dimension_numbers = #tpu.dot_dimension_numbers<[1], [1], [0], [0], [0, 0, 1, 0], [], []>} : vector<8x8xf32>, vector<8x8xf32>, vector<8x8xf32> -> vector<8x8xf32>
    %cst_27 = arith.constant dense<0xFF800000> : vector<8xf32>
    %73 = vector.multi_reduction <maximumf>, %72, %cst_27 [1] : vector<8x8xf32> to vector<8xf32>
    %74 = vector.shape_cast %73 : vector<8xf32> to vector<8x1xf32>
    %75 = vector.broadcast %74 : vector<8x1xf32> to vector<8x8xf32>
    %76 = arith.subf %72, %75 : vector<8x8xf32>
    %77 = math.exp %76 : vector<8x8xf32>
    %cst_28 = arith.constant dense<0.000000e+00> : vector<8xf32>
    %78 = vector.multi_reduction <add>, %77, %cst_28 [1] : vector<8x8xf32> to vector<8xf32>
    %79 = vector.shape_cast %78 : vector<8xf32> to vector<8x1xf32>
    %cst_29 = arith.constant dense<0.000000e+00> : vector<8x8xf32>
    %80 = tpu.matmul %77, %71, %cst_29 {dimension_numbers = #tpu.dot_dimension_numbers<[1], [0], [0], [1], [0, 0, 1, 1], [], []>} : vector<8x8xf32>, vector<8x8xf32>, vector<8x8xf32> -> vector<8x8xf32>
    %81 = tpu.reciprocal %79 {approx = true} : vector<8x1xf32> -> vector<8x1xf32>
    %82 = vector.broadcast %81 : vector<8x1xf32> to vector<8x8xf32>
    %83 = arith.mulf %80, %82 : vector<8x8xf32>
    %84 = vector.extract_strided_slice %12 {offsets = [24, 0], sizes = [8, 32], strides = [1, 1]} : vector<32x32xf32> to vector<8x32xf32>
    %cst_30 = arith.constant dense<0.000000e+00> : vector<8x32xf32>
    %85 = tpu.matmul %83, %84, %cst_30 {dimension_numbers = #tpu.dot_dimension_numbers<[1], [0], [0], [1], [0, 0, 1, 1], [], []>} : vector<8x8xf32>, vector<8x32xf32>, vector<8x32xf32> -> vector<8x32xf32>
    %86 = arith.addf %68, %85 : vector<8x32xf32>
    %c0_31 = arith.constant 0 : index
    %c0_32 = arith.constant 0 : index
    %c0_33 = arith.constant 0 : index
    %87 = vector.load %arg6[%c0_31, %c0_32, %c0_33] : memref<1x8x32xf32, #tpu.memory_space<vmem>>, vector<1x8x32xf32>
    %88 = vector.shape_cast %87 : vector<1x8x32xf32> to vector<8x32xf32>
    %89 = vector.shape_cast %86 : vector<8x32xf32> to vector<1x8x32xf32>
    tpu.vector_store %arg6[%c0_31, %c0_32, %c0_33], %89 {strides = array<i32>} : memref<1x8x32xf32, #tpu.memory_space<vmem>>, vector<1x8x32xf32>,
    return
  }
  func.func @transform_0(%arg0: i32) -> (i32, i32, i32) {
    %c0_i32 = arith.constant 0 : i32
    %c0_i32_0 = arith.constant 0 : i32
    %c0_i32_1 = arith.constant 0 : i32
    return %arg0, %c0_i32, %c0_i32_0 : i32, i32, i32
  }
  func.func @transform_1(%arg0: i32) -> (i32, i32) {
    %c0_i32 = arith.constant 0 : i32
    %c0_i32_0 = arith.constant 0 : i32
    %c0_i32_1 = arith.constant 0 : i32
    return %c0_i32, %c0_i32_0 : i32, i32
  }
  func.func @transform_2(%arg0: i32) -> (i32, i32) {
    %c0_i32 = arith.constant 0 : i32
    %c0_i32_0 = arith.constant 0 : i32
    %c0_i32_1 = arith.constant 0 : i32
    return %c0_i32, %c0_i32_0 : i32, i32
  }
  func.func @transform_3(%arg0: i32) -> (i32, i32) {
    %c0_i32 = arith.constant 0 : i32
    %c0_i32_0 = arith.constant 0 : i32
    %c0_i32_1 = arith.constant 0 : i32
    return %c0_i32, %c0_i32_0 : i32, i32
  }
  func.func @transform_4(%arg0: i32) -> (i32, i32) {
    %c0_i32 = arith.constant 0 : i32
    %c0_i32_0 = arith.constant 0 : i32
    %c0_i32_1 = arith.constant 0 : i32
    return %c0_i32, %c0_i32_0 : i32, i32
  }
  func.func @transform_5(%arg0: i32) -> (i32, i32, i32) {
    %c0_i32 = arith.constant 0 : i32
    %c0_i32_0 = arith.constant 0 : i32
    %c0_i32_1 = arith.constant 0 : i32
    return %arg0, %c0_i32, %c0_i32_0 : i32, i32, i32
  }
}

</mosaic_0001>

<llo_original>
// kernel: general_attn_forward.1
$region0: #{general_attn_forward.1}
  #allocation0 [shape = 'u32[]', space=smem, size = 0x4, offset = 0x4, fixed_abs, tag = 'smem constant byte address 0x4 - core index']
  #allocation1 [shape = 'u32[72,128]{1,0:T(1,128)}', space=vmem, size = 0x9000, scoped, tag = 'internal scratch']
  %s0 = inlined_call_operand.hbm [shape: f32[2,8,32], index: 0, kind: input, shape index: {}]
  %s1 = inlined_call_operand.hbm [shape: f32[32,96], index: 1, kind: input, shape index: {}]
  %s2 = inlined_call_operand.vmem [shape: f32[1,96], index: 2, kind: input, shape index: {}]
  %s3 = inlined_call_operand.hbm [shape: f32[32,32], index: 3, kind: input, shape index: {}]
  %s4 = inlined_call_operand.vmem [shape: f32[1,32], index: 4, kind: input, shape index: {}]
  %s5 = inlined_call_operand.hbm [shape: f32[2,8,32], index: 5, kind: output, shape index: {}]
  %s6 = sld [smem:[#allocation0]]
  $region65: #{general_attn_forward.1} parent=0
    _
  %s8 = ssub.s32 1, %s6
  %s9 = scalar_select 0, %s8, %s6
  $region1: #{general_attn_forward.1} parent=0
    #allocation2 [shape = 'u8[8192]{0}', space=vmem, size = 0x2000, scoped, tag = 'input window, operand 0']
    #allocation3 [shape = 's32[2]{0}', space=sflag, size = 0x8, scoped, tag = 'scoped memory for general_attn_forward.1']
    #allocation4 [shape = 's32[2]{0}', space=sflag, size = 0x8, scoped, tag = 'scoped memory for general_attn_forward.1']
    #allocation5 [shape = 'u8[16384]{0}', space=vmem, size = 0x4000, scoped, tag = 'input window, operand 1, single buffered']
    #allocation6 [shape = 's32[1]{0}', space=sflag, size = 0x4, scoped, tag = 'scoped memory for general_attn_forward.1']
    #allocation7 [shape = 'u8[16384]{0}', space=vmem, size = 0x4000, scoped, tag = 'input window, operand 3, single buffered']
    #allocation8 [shape = 'u8[8192]{0}', space=vmem, size = 0x2000, scoped, tag = 'output window, operand 0']
    %10 = vsyncpa [#allocation3], 0
    %s11 = scalar_lea.sflag [#allocation3], 1
    %12 = vsyncpa %s11, 0
    %13 = vsyncpa [#allocation6], 0
    %14 = vsyncpa [#allocation4], 0
    %s15 = scalar_lea.sflag [#allocation4], 1
    %16 = vsyncpa %s15, 0
    loop: start=0, step=1, limit=4
    $region2: #{general_attn_forward.1} parent=1 // loop_pre_header
      _
    $region3: #{general_attn_forward.1} parent=1 // loop_header
      %s18 = sphi 0, %s22
      %p19 = scmp.ge.s32.totalorder %s18, 4
      %s28 = sphi 0, %s30
      %s31 = sphi 0, %s28
      %s32 = sphi 0, %s31
      %s48 = sphi 0, %s32
      %s52 = sphi 0, %s52
      %s54 = sphi 0, %s52
      %s55 = sphi 0, %s54
      %s69 = sphi 0, %s55
      %s73 = sphi 0, %s73
      %s75 = sphi 0, %s73
      %s76 = sphi 0, %s75
      %s90 = sphi 0, %s76
      %s94 = sphi 0, %s94
      %s96 = sphi 0, %s94
      %s97 = sphi 0, %s96
      %s111 = sphi 0, %s97
      %s115 = sphi 0, %s115
      %s117 = sphi 0, %s115
      %s118 = sphi 0, %s117
      %s132 = sphi 0, %s118
      %s138 = sphi 0, %s140
      %s141 = sphi 0, %s138
      %s142 = sphi 0, %s141
      %s158 = sphi 0, %s142
    $region4: #{general_attn_forward.1} parent=1 // loop_header_branch
      %21 = sbr.rel (%p19) target = $region8
    $region5: #{general_attn_forward.1} parent=1 // loop_body
      %s23 = ssub.s32 %s18, 1
      %s24 = ssub.s32 %s18, 2
      %s25 = sadd.s32 %s18, 1
      %s26 = ssub.s32 %s18, %s25
      %p27 = scmp.eq.s32.totalorder %s26, 0
      %s29 = sadd.s32 %s28, 1
      %s30 = scalar_select %p27, %s28, %s29
      %p33 = pneg %p27
      %p34 = scmp.eq.s32.totalorder %s18, 1
      %p35 = por %p33, %p34
      %p36 = scmp.ne.s32.totalorder %s28, %s31
      %p37 = scmp.eq.s32.totalorder %s18, 0
      %p38 = por %p36, %p37
      %p39 = scmp.ne.s32.totalorder %s28, %s31
      %p40 = scmp.eq.s32.totalorder %s23, 1
      %p41 = por %p39, %p40
      %p42 = scmp.ne.s32.totalorder %s31, %s32
      %p43 = scmp.eq.s32.totalorder %s23, 0
      %p44 = por %p42, %p43
      %p45 = scmp.ne.s32.totalorder %s31, %s32
      %p46 = scmp.eq.s32.totalorder %s24, 1
      %p47 = por %p45, %p46
      %p49 = scmp.ne.s32.totalorder %s32, %s48
      %p50 = scmp.eq.s32.totalorder %s24, 0
      %p51 = por %p49, %p50
      %s53 = sadd.s32 %s52, 1
      %p56 = scmp.eq.s32.totalorder %s18, 1
      %p57 = scmp.ne.s32.totalorder %s52, %s54
      %p58 = scmp.eq.s32.totalorder %s18, 0
      %p59 = por %p57, %p58
      %p60 = scmp.ne.s32.totalorder %s52, %s54
      %p61 = scmp.eq.s32.totalorder %s23, 1
      %p62 = por %p60, %p61
      %p63 = scmp.ne.s32.totalorder %s54, %s55
      %p64 = scmp.eq.s32.totalorder %s23, 0
      %p65 = por %p63, %p64
      %p66 = scmp.ne.s32.totalorder %s54, %s55
      %p67 = scmp.eq.s32.totalorder %s24, 1
      %p68 = por %p66, %p67
      %p70 = scmp.ne.s32.totalorder %s55, %s69
      %p71 = scmp.eq.s32.totalorder %s24, 0
      %p72 = por %p70, %p71
      %s74 = sadd.s32 %s73, 1
      %p77 = scmp.eq.s32.totalorder %s18, 1
      %p78 = scmp.ne.s32.totalorder %s73, %s75
      %p79 = scmp.eq.s32.totalorder %s18, 0
      %p80 = por %p78, %p79
      %p81 = scmp.ne.s32.totalorder %s73, %s75
      %p82 = scmp.eq.s32.totalorder %s23, 1
      %p83 = por %p81, %p82
      %p84 = scmp.ne.s32.totalorder %s75, %s76
      %p85 = scmp.eq.s32.totalorder %s23, 0
      %p86 = por %p84, %p85
      %p87 = scmp.ne.s32.totalorder %s75, %s76
      %p88 = scmp.eq.s32.totalorder %s24, 1
      %p89 = por %p87, %p88
      %p91 = scmp.ne.s32.totalorder %s76, %s90
      %p92 = scmp.eq.s32.totalorder %s24, 0
      %p93 = por %p91, %p92
      %s95 = sadd.s32 %s94, 1
      %p98 = scmp.eq.s32.totalorder %s18, 1
      %p99 = scmp.ne.s32.totalorder %s94, %s96
      %p100 = scmp.eq.s32.totalorder %s18, 0
      %p101 = por %p99, %p100
      %p102 = scmp.ne.s32.totalorder %s94, %s96
      %p103 = scmp.eq.s32.totalorder %s23, 1
      %p104 = por %p102, %p103
      %p105 = scmp.ne.s32.totalorder %s96, %s97
      %p106 = scmp.eq.s32.totalorder %s23, 0
      %p107 = por %p105, %p106
      %p108 = scmp.ne.s32.totalorder %s96, %s97
      %p109 = scmp.eq.s32.totalorder %s24, 1
      %p110 = por %p108, %p109
      %p112 = scmp.ne.s32.totalorder %s97, %s111
      %p113 = scmp.eq.s32.totalorder %s24, 0
      %p114 = por %p112, %p113
      %s116 = sadd.s32 %s115, 1
      %p119 = scmp.eq.s32.totalorder %s18, 1
      %p120 = scmp.ne.s32.totalorder %s115, %s117
      %p121 = scmp.eq.s32.totalorder %s18, 0
      %p122 = por %p120, %p121
      %p123 = scmp.ne.s32.totalorder %s115, %s117
      %p124 = scmp.eq.s32.totalorder %s23, 1
      %p125 = por %p123, %p124
      %p126 = scmp.ne.s32.totalorder %s117, %s118
      %p127 = scmp.eq.s32.totalorder %s23, 0
      %p128 = por %p126, %p127
      %p129 = scmp.ne.s32.totalorder %s117, %s118
      %p130 = scmp.eq.s32.totalorder %s24, 1
      %p131 = por %p129, %p130
      %p133 = scmp.ne.s32.totalorder %s118, %s132
      %p134 = scmp.eq.s32.totalorder %s24, 0
      %p135 = por %p133, %p134
      %s136 = ssub.s32 %s18, %s25
      %p137 = scmp.eq.s32.totalorder %s136, 0
      %s139 = sadd.s32 %s138, 1
      %s140 = scalar_select %p137, %s138, %s139
      %p143 = pneg %p137
      %p144 = scmp.eq.s32.totalorder %s18, 1
      %p145 = por %p143, %p144
      %p146 = scmp.ne.s32.totalorder %s138, %s141
      %p147 = scmp.eq.s32.totalorder %s18, 0
      %p148 = por %p146, %p147
      %p149 = scmp.ne.s32.totalorder %s138, %s141
      %p150 = scmp.eq.s32.totalorder %s23, 1
      %p151 = por %p149, %p150
      %p152 = scmp.ne.s32.totalorder %s141, %s142
      %p153 = scmp.eq.s32.totalorder %s23, 0
      %p154 = por %p152, %p153
      %p155 = scmp.ne.s32.totalorder %s141, %s142
      %p156 = scmp.eq.s32.totalorder %s24, 1
      %p157 = por %p155, %p156
      %p159 = scmp.ne.s32.totalorder %s142, %s158
      %p160 = scmp.eq.s32.totalorder %s24, 0
      %p161 = por %p159, %p160
      %p162 = scmp.le.s32.totalorder 1, %s18
      %p163 = scmp.lt.s32.totalorder %s18, 3
      %p164 = pnand %p162, %p163
      %p165 = pneg %p164
      // Predicated region
      $region9: #{general_attn_forward.1} parent=5 // pred_check
        _
      $region10: #{general_attn_forward.1} parent=5 // pred_check_branch
        %167 = sbr.rel (%p164) target = $region12
      $region11: #{general_attn_forward.1} parent=5 // pred_region
        %s168 = ssub.s32 %s18, 1
        // Predicated region
        $region13: #{general_attn_forward.1} parent=11 // pred_check
          %p169 = pneg %p65
        $region14: #{general_attn_forward.1} parent=11 // pred_check_branch
          %171 = sbr.rel (%p169) target = $region16
        $region15: #{general_attn_forward.1} parent=11 // pred_region
          %173 = vsyncadd [#allocation6], 0
          %s174 = sshll.u32 %s1, 4
          %s175 = int_to_ptr.hbm [resolvable:$true] %s174
          %s176 = sshll.u32 [#allocation5], 4
          %s177 = int_to_ptr.vmem [resolvable:$true] %s176
          %182 = dma.hbm_to_vmem [thread:$0]  %s175, 512, %s177, [#allocation6], 128, 128, 8
        $region16: #{general_attn_forward.1} parent=11 // pred_fallthru
          _
        // Predicated region
        $region17: #{general_attn_forward.1} parent=11 // pred_check
          %p183 = pneg %p86
        $region18: #{general_attn_forward.1} parent=11 // pred_check_branch
          %185 = sbr.rel (%p183) target = $region20
        $region19: #{general_attn_forward.1} parent=11 // pred_region
          _
        $region20: #{general_attn_forward.1} parent=11 // pred_fallthru
          _
        // Predicated region
        $region21: #{general_attn_forward.1} parent=11 // pred_check
          %p186 = pneg %p107
        $region22: #{general_attn_forward.1} parent=11 // pred_check_branch
          %188 = sbr.rel (%p186) target = $region24
        $region23: #{general_attn_forward.1} parent=11 // pred_region
          %190 = vsyncadd [#allocation6], 0
          %s191 = sshll.u32 %s3, 4
          %s192 = int_to_ptr.hbm [resolvable:$true] %s191
          %s193 = sshll.u32 [#allocation7], 4
          %s194 = int_to_ptr.vmem [resolvable:$true] %s193
          %199 = dma.hbm_to_vmem [thread:$0]  %s192, 512, %s194, [#allocation6], 128, 128, 8
        $region24: #{general_attn_forward.1} parent=11 // pred_fallthru
          _
        // Predicated region
        $region25: #{general_attn_forward.1} parent=11 // pred_check
          %p200 = pneg %p128
        $region26: #{general_attn_forward.1} parent=11 // pred_check_branch
          %202 = sbr.rel (%p200) target = $region28
        $region27: #{general_attn_forward.1} parent=11 // pred_region
          _
        $region28: #{general_attn_forward.1} parent=11 // pred_fallthru
          _
      $region12: #{general_attn_forward.1} parent=5 // pred_fallthru
        _
      %p203 = scmp.lt.s32.totalorder %s18, 2
      // Predicated region
      $region29: #{general_attn_forward.1} parent=5 // pred_check
        %p204 = pneg %p203
      $region30: #{general_attn_forward.1} parent=5 // pred_check_branch
        %206 = sbr.rel (%p204) target = $region32
      $region31: #{general_attn_forward.1} parent=5 // pred_region
        // Predicated region
        $region33: #{general_attn_forward.1} parent=31 // pred_check
          %p207 = pneg %p38
        $region34: #{general_attn_forward.1} parent=31 // pred_check_branch
          %209 = sbr.rel (%p207) target = $region36
        $region35: #{general_attn_forward.1} parent=31 // pred_region
          %s210 = sand.u32 %s28, 1
          %s211 = scalar_lea.sflag [#allocation3], %s210
          %s212 = sand.u32 %s28, 1
          %s213 = smul.addr %s212, 8
          %s214 = scalar_lea.vmem [#allocation2], %s213
          %216 = vsyncadd %s211, 0
          %s217 = smul.addr %s18, 8
          %s218 = scalar_lea.hbm %s0, %s217
          %s220 = sshll.u32 %s218, 4
          %s221 = int_to_ptr.hbm [resolvable:$true] %s220
          %s222 = sshll.u32 %s214, 4
          %s223 = int_to_ptr.vmem [resolvable:$true] %s222
          %225 = dma.hbm_to_vmem [thread:$0]  %s221, 128, %s223, %s211
        $region36: #{general_attn_forward.1} parent=31 // pred_fallthru
          _
      $region32: #{general_attn_forward.1} parent=5 // pred_fallthru
        _
      %p226 = scmp.le.s32.totalorder 1, %s18
      %p227 = scmp.lt.s32.totalorder %s18, 3
      %p228 = pnand %p226, %p227
      %p229 = pneg %p228
      // Predicated region
      $region37: #{general_attn_forward.1} parent=5 // pred_check
        _
      $region38: #{general_attn_forward.1} parent=5 // pred_check_branch
        %231 = sbr.rel (%p228) target = $region40
      $region39: #{general_attn_forward.1} parent=5 // pred_region
        %s232 = ssub.s32 %s18, 1
        %s233 = sand.u32 %s31, 1
        %s234 = scalar_lea.sflag [#allocation3], %s233
        %s235 = sand.u32 %s31, 1
        %s236 = smul.addr %s235, 8
        %s237 = scalar_lea.vmem [#allocation2], %s236
        // Predicated region
        $region41: #{general_attn_forward.1} parent=39 // pred_check
          %p238 = pneg %p44
        $region42: #{general_attn_forward.1} parent=39 // pred_check_branch
          %240 = sbr.rel (%p238) target = $region44
        $region43: #{general_attn_forward.1} parent=39 // pred_region
          %242 = dma.done %s234, 128
        $region44: #{general_attn_forward.1} parent=39 // pred_fallthru
          _
        // Predicated region
        $region45: #{general_attn_forward.1} parent=39 // pred_check
          %p243 = pneg %p65
        $region46: #{general_attn_forward.1} parent=39 // pred_check_branch
          %245 = sbr.rel (%p243) target = $region48
        $region47: #{general_attn_forward.1} parent=39 // pred_region
          %247 = dma.done [#allocation6], 512
        $region48: #{general_attn_forward.1} parent=39 // pred_fallthru
          _
        // Predicated region
        $region49: #{general_attn_forward.1} parent=39 // pred_check
          %p248 = pneg %p107
        $region50: #{general_attn_forward.1} parent=39 // pred_check_branch
          %250 = sbr.rel (%p248) target = $region52
        $region51: #{general_attn_forward.1} parent=39 // pred_region
          %252 = dma.done [#allocation6], 512
        $region52: #{general_attn_forward.1} parent=39 // pred_fallthru
          _
        %s253 = sand.u32 %s31, 1
        %s254 = scalar_lea.sflag [#allocation3], %s253
        %s255 = sand.u32 %s31, 1
        %s256 = smul.addr %s255, 8
        %s257 = scalar_lea.vmem [#allocation2], %s256
        %p258 = pneg %p44
        %p259 = pneg %p41
        %p260 = pneg %p65
        %p261 = pneg %p62
        %p262 = pneg %p86
        %p263 = pneg %p83
        %p264 = pneg %p107
        %p265 = pneg %p104
        %p266 = pneg %p128
        %p267 = pneg %p125
        %p268 = pneg %p154
        %p269 = pneg %p151
        %s270 = sand.u32 %s141, 1
        %s271 = scalar_lea.sflag [#allocation4], %s270
        %s272 = sand.u32 %s141, 1
        %s273 = smul.addr %s272, 8
        %s274 = scalar_lea.vmem [#allocation8], %s273
        %v275 = vld [vmem:[%s237] sm:$0xff]
        %v276 = vld [vmem:[#allocation5] sm:$0xff]
        %v277 = vld [vmem:[#allocation5 + $0x8] sm:$0xff]
        %v278 = vld [vmem:[#allocation5 + $0x10] sm:$0xff]
        %v279 = vld [vmem:[#allocation5 + $0x18] sm:$0xff]
        %v280 = vld [vmem:[%s2] sm:$0x1]
        %v282 = vperm.slane %v280, 0
        %vm284 = vcmask 261120
        %v286 = vsel %vm284, %v275, 0
        %288 = vmatpush.msra.mxu0 0.0
        %289 = vmatpush.msra.mxu0 0.0
        %290 = vmatpush.msra.mxu0 0.0
        %291 = vmatpush.msra.mxu0 0.0
        %292 = vmatpush.msra.mxu0 0.0
        %293 = vmatpush.msra.mxu0 0.0
        %294 = vmatpush.msra.mxu0 0.0
        %295 = vmatpush.msra.mxu0 0.0
        %296 = vmatpush.msra.mxu0 0.0
        %297 = vmatpush.msra.mxu0 0.0
        %298 = vmatpush.msra.mxu0 0.0
        %299 = vmatpush.msra.mxu0 0.0
        %300 = vmatpush.msra.mxu0 %v279
        %301 = vmatpush.msra.mxu0 %v278
        %302 = vmatpush.msra.mxu0 %v277
        %303 = vmatpush.msra.mxu0 %v276
        %304 = vmatmul.f32.gmra.mxu0 %v286
        %v305 = vpop.f32.mrf.mxu0
        %v306 = vadd.f32 %v282, %v305
        %307 = vdwg.mxu0
        %v308 = vmul.f32 %v306, 0.35355338
        %v309 = vld [vmem:[#allocation7] sm:$0xff]
        %v310 = vld [vmem:[#allocation7 + $0x8] sm:$0xff]
        %v311 = vld [vmem:[#allocation7 + $0x10] sm:$0xff]
        %v312 = vld [vmem:[#allocation7 + $0x18] sm:$0xff]
        %v313 = vld [vmem:[%s4] sm:$0x1]
        %315 = vrot.lane.b32.xlu0 %v306, 96
        %v316 = vpop.permute.xlu0 %315
        %vm317 = vcmask 64512
        %v319 = vsel %vm317, %v308, 0
        %v321 = vsel %vm317, %v316, 0
        %323 = vmatpush.xpose.msra.mxu0 0.0
        %324 = vmatpush.xpose.msra.mxu0 0.0
        %325 = vmatpush.xpose.msra.mxu0 0.0
        %326 = vmatpush.xpose.msra.mxu0 0.0
        %327 = vmatpush.xpose.msra.mxu0 0.0
        %328 = vmatpush.xpose.msra.mxu0 0.0
        %329 = vmatpush.xpose.msra.mxu0 0.0
        %330 = vmatpush.xpose.msra.mxu0 0.0
        %331 = vmatpush.xpose.msra.mxu0 0.0
        %332 = vmatpush.xpose.msra.mxu0 0.0
        %333 = vmatpush.xpose.msra.mxu0 0.0
        %334 = vmatpush.xpose.msra.mxu0 0.0
        %335 = vmatpush.xpose.msra.mxu0 0.0
        %336 = vmatpush.xpose.msra.mxu0 0.0
        %337 = vmatpush.xpose.msra.mxu0 0.0
        %338 = vmatpush.xpose.msra.mxu0 %v321
        %339 = vmatmul.f32.gmra.mxu0 %v319
        %v340 = vpop.f32.mrf.mxu0
        %v341 = vadd.f32 0.0, %v340
        %342 = vdwg.mxu0
        %v343 = vsel %vm317, %v341, -inf
        %344 = vmax.xlane.f32.xlu0 %v343
        %v345 = vpop.xlane.xlu0 %344
        %v346 = vsub.f32 %v341, %v345
        %v347 = vmul.f32 %v346, 1.442695
        %v348 = vpow.pop %v347
        %v349 = vsel %vm317, %v348, 0.0
        %350 = vadd.xlane.f32.xlu0 %v349
        %v351 = vpop.xlane.xlu0 %350
        %352 = vrot.lane.b32.xlu0 %v306, 64
        %v353 = vpop.permute.xlu0 %352
        %v356 = vsel %vm317, %v348, 0
        %358 = vmatpush.msra.mxu0 0.0
        %359 = vmatpush.msra.mxu0 0.0
        %360 = vmatpush.msra.mxu0 0.0
        %361 = vmatpush.msra.mxu0 0.0
        %362 = vmatpush.msra.mxu0 0.0
        %363 = vmatpush.msra.mxu0 0.0
        %364 = vmatpush.msra.mxu0 0.0
        %365 = vmatpush.msra.mxu0 0.0
        %366 = vmatpush.msra.mxu0 0.0
        %367 = vmatpush.msra.mxu0 0.0
        %368 = vmatpush.msra.mxu0 0.0
        %369 = vmatpush.msra.mxu0 0.0
        %370 = vmatpush.msra.mxu0 0.0
        %371 = vmatpush.msra.mxu0 0.0
        %372 = vmatpush.msra.mxu0 0.0
        %373 = vmatpush.msra.mxu0 %v353
        %374 = vmatmul.f32.gmra.mxu0 %v356
        %v375 = vpop.f32.mrf.mxu0
        %v376 = vadd.f32 0.0, %v375
        %377 = vdwg.mxu0
        %v378 = vrcp.pop %v351
        %v379 = vmul.f32 %v376, %v378
        %v381 = vsel %vm317, %v379, 0
        %383 = vmatpush.msra.mxu0 0.0
        %384 = vmatpush.msra.mxu0 0.0
        %385 = vmatpush.msra.mxu0 0.0
        %386 = vmatpush.msra.mxu0 0.0
        %387 = vmatpush.msra.mxu0 0.0
        %388 = vmatpush.msra.mxu0 0.0
        %389 = vmatpush.msra.mxu0 0.0
        %390 = vmatpush.msra.mxu0 0.0
        %391 = vmatpush.msra.mxu0 0.0
        %392 = vmatpush.msra.mxu0 0.0
        %393 = vmatpush.msra.mxu0 0.0
        %394 = vmatpush.msra.mxu0 0.0
        %395 = vmatpush.msra.mxu0 0.0
        %396 = vmatpush.msra.mxu0 0.0
        %397 = vmatpush.msra.mxu0 0.0
        %398 = vmatpush.msra.mxu0 %v309
        %399 = vmatmul.f32.gmra.mxu0 %v381
        %v400 = vpop.f32.mrf.mxu0
        %v401 = vadd.f32 0.0, %v400
        %402 = vdwg.mxu0
        %v404 = vperm.slane %v313, 0
        %v406 = vadd.f32 %v404, %v401
        %407 = vrot.lane.b32.xlu0 %v308, 120
        %v408 = vpop.permute.xlu0 %407
        %409 = vrot.lane.b32.xlu0 %v306, 88
        %v410 = vpop.permute.xlu0 %409
        %v411 = vsel %vm317, %v408, 0
        %v413 = vsel %vm317, %v410, 0
        %415 = vmatpush.xpose.msra.mxu0 0.0
        %416 = vmatpush.xpose.msra.mxu0 0.0
        %417 = vmatpush.xpose.msra.mxu0 0.0
        %418 = vmatpush.xpose.msra.mxu0 0.0
        %419 = vmatpush.xpose.msra.mxu0 0.0
        %420 = vmatpush.xpose.msra.mxu0 0.0
        %421 = vmatpush.xpose.msra.mxu0 0.0
        %422 = vmatpush.xpose.msra.mxu0 0.0
        %423 = vmatpush.xpose.msra.mxu0 0.0
        %424 = vmatpush.xpose.msra.mxu0 0.0
        %425 = vmatpush.xpose.msra.mxu0 0.0
        %426 = vmatpush.xpose.msra.mxu0 0.0
        %427 = vmatpush.xpose.msra.mxu0 0.0
        %428 = vmatpush.xpose.msra.mxu0 0.0
        %429 = vmatpush.xpose.msra.mxu0 0.0
        %430 = vmatpush.xpose.msra.mxu0 %v413
        %431 = vmatmul.f32.gmra.mxu0 %v411
        %v432 = vpop.f32.mrf.mxu0
        %v433 = vadd.f32 0.0, %v432
        %434 = vdwg.mxu0
        %v435 = vsel %vm317, %v433, -inf
        %436 = vmax.xlane.f32.xlu0 %v435
        %v437 = vpop.xlane.xlu0 %436
        %v438 = vsub.f32 %v433, %v437
        %v439 = vmul.f32 %v438, 1.442695
        %v440 = vpow.pop %v439
        %v441 = vsel %vm317, %v440, 0.0
        %442 = vadd.xlane.f32.xlu0 %v441
        %v443 = vpop.xlane.xlu0 %442
        %444 = vrot.lane.b32.xlu0 %v306, 56
        %v445 = vpop.permute.xlu0 %444
        %v448 = vsel %vm317, %v440, 0
        %450 = vmatpush.msra.mxu0 0.0
        %451 = vmatpush.msra.mxu0 0.0
        %452 = vmatpush.msra.mxu0 0.0
        %453 = vmatpush.msra.mxu0 0.0
        %454 = vmatpush.msra.mxu0 0.0
        %455 = vmatpush.msra.mxu0 0.0
        %456 = vmatpush.msra.mxu0 0.0
        %457 = vmatpush.msra.mxu0 0.0
        %458 = vmatpush.msra.mxu0 0.0
        %459 = vmatpush.msra.mxu0 0.0
        %460 = vmatpush.msra.mxu0 0.0
        %461 = vmatpush.msra.mxu0 0.0
        %462 = vmatpush.msra.mxu0 0.0
        %463 = vmatpush.msra.mxu0 0.0
        %464 = vmatpush.msra.mxu0 0.0
        %465 = vmatpush.msra.mxu0 %v445
        %466 = vmatmul.f32.gmra.mxu0 %v448
        %v467 = vpop.f32.mrf.mxu0
        %v468 = vadd.f32 0.0, %v467
        %469 = vdwg.mxu0
        %v470 = vrcp.pop %v443
        %v471 = vmul.f32 %v468, %v470
        %v473 = vsel %vm317, %v471, 0
        %475 = vmatpush.msra.mxu0 0.0
        %476 = vmatpush.msra.mxu0 0.0
        %477 = vmatpush.msra.mxu0 0.0
        %478 = vmatpush.msra.mxu0 0.0
        %479 = vmatpush.msra.mxu0 0.0
        %480 = vmatpush.msra.mxu0 0.0
        %481 = vmatpush.msra.mxu0 0.0
        %482 = vmatpush.msra.mxu0 0.0
        %483 = vmatpush.msra.mxu0 0.0
        %484 = vmatpush.msra.mxu0 0.0
        %485 = vmatpush.msra.mxu0 0.0
        %486 = vmatpush.msra.mxu0 0.0
        %487 = vmatpush.msra.mxu0 0.0
        %488 = vmatpush.msra.mxu0 0.0
        %489 = vmatpush.msra.mxu0 0.0
        %490 = vmatpush.msra.mxu0 %v310
        %491 = vmatmul.f32.gmra.mxu0 %v473
        %v492 = vpop.f32.mrf.mxu0
        %v493 = vadd.f32 0.0, %v492
        %494 = vdwg.mxu0
        %v495 = vadd.f32 %v406, %v493
        %496 = vrot.lane.b32.xlu0 %v308, 112
        %v497 = vpop.permute.xlu0 %496
        %498 = vrot.lane.b32.xlu0 %v306, 80
        %v499 = vpop.permute.xlu0 %498
        %v500 = vsel %vm317, %v497, 0
        %v502 = vsel %vm317, %v499, 0
        %504 = vmatpush.xpose.msra.mxu0 0.0
        %505 = vmatpush.xpose.msra.mxu0 0.0
        %506 = vmatpush.xpose.msra.mxu0 0.0
        %507 = vmatpush.xpose.msra.mxu0 0.0
        %508 = vmatpush.xpose.msra.mxu0 0.0
        %509 = vmatpush.xpose.msra.mxu0 0.0
        %510 = vmatpush.xpose.msra.mxu0 0.0
        %511 = vmatpush.xpose.msra.mxu0 0.0
        %512 = vmatpush.xpose.msra.mxu0 0.0
        %513 = vmatpush.xpose.msra.mxu0 0.0
        %514 = vmatpush.xpose.msra.mxu0 0.0
        %515 = vmatpush.xpose.msra.mxu0 0.0
        %516 = vmatpush.xpose.msra.mxu0 0.0
        %517 = vmatpush.xpose.msra.mxu0 0.0
        %518 = vmatpush.xpose.msra.mxu0 0.0
        %519 = vmatpush.xpose.msra.mxu0 %v502
        %520 = vmatmul.f32.gmra.mxu0 %v500
        %v521 = vpop.f32.mrf.mxu0
        %v522 = vadd.f32 0.0, %v521
        %523 = vdwg.mxu0
        %v524 = vsel %vm317, %v522, -inf
        %525 = vmax.xlane.f32.xlu0 %v524
        %v526 = vpop.xlane.xlu0 %525
        %v527 = vsub.f32 %v522, %v526
        %v528 = vmul.f32 %v527, 1.442695
        %v529 = vpow.pop %v528
        %v530 = vsel %vm317, %v529, 0.0
        %531 = vadd.xlane.f32.xlu0 %v530
        %v532 = vpop.xlane.xlu0 %531
        %533 = vrot.lane.b32.xlu0 %v306, 48
        %v534 = vpop.permute.xlu0 %533
        %v537 = vsel %vm317, %v529, 0
        %539 = vmatpush.msra.mxu0 0.0
        %540 = vmatpush.msra.mxu0 0.0
        %541 = vmatpush.msra.mxu0 0.0
        %542 = vmatpush.msra.mxu0 0.0
        %543 = vmatpush.msra.mxu0 0.0
        %544 = vmatpush.msra.mxu0 0.0
        %545 = vmatpush.msra.mxu0 0.0
        %546 = vmatpush.msra.mxu0 0.0
        %547 = vmatpush.msra.mxu0 0.0
        %548 = vmatpush.msra.mxu0 0.0
        %549 = vmatpush.msra.mxu0 0.0
        %550 = vmatpush.msra.mxu0 0.0
        %551 = vmatpush.msra.mxu0 0.0
        %552 = vmatpush.msra.mxu0 0.0
        %553 = vmatpush.msra.mxu0 0.0
        %554 = vmatpush.msra.mxu0 %v534
        %555 = vmatmul.f32.gmra.mxu0 %v537
        %v556 = vpop.f32.mrf.mxu0
        %v557 = vadd.f32 0.0, %v556
        %558 = vdwg.mxu0
        %v559 = vrcp.pop %v532
        %v560 = vmul.f32 %v557, %v559
        %v562 = vsel %vm317, %v560, 0
        %564 = vmatpush.msra.mxu0 0.0
        %565 = vmatpush.msra.mxu0 0.0
        %566 = vmatpush.msra.mxu0 0.0
        %567 = vmatpush.msra.mxu0 0.0
        %568 = vmatpush.msra.mxu0 0.0
        %569 = vmatpush.msra.mxu0 0.0
        %570 = vmatpush.msra.mxu0 0.0
        %571 = vmatpush.msra.mxu0 0.0
        %572 = vmatpush.msra.mxu0 0.0
        %573 = vmatpush.msra.mxu0 0.0
        %574 = vmatpush.msra.mxu0 0.0
        %575 = vmatpush.msra.mxu0 0.0
        %576 = vmatpush.msra.mxu0 0.0
        %577 = vmatpush.msra.mxu0 0.0
        %578 = vmatpush.msra.mxu0 0.0
        %579 = vmatpush.msra.mxu0 %v311
        %580 = vmatmul.f32.gmra.mxu0 %v562
        %v581 = vpop.f32.mrf.mxu0
        %v582 = vadd.f32 0.0, %v581
        %583 = vdwg.mxu0
        %v584 = vadd.f32 %v495, %v582
        %585 = vrot.lane.b32.xlu0 %v308, 104
        %v586 = vpop.permute.xlu0 %585
        %587 = vrot.lane.b32.xlu0 %v306, 72
        %v588 = vpop.permute.xlu0 %587
        %v589 = vsel %vm317, %v586, 0
        %v591 = vsel %vm317, %v588, 0
        %593 = vmatpush.xpose.msra.mxu0 0.0
        %594 = vmatpush.xpose.msra.mxu0 0.0
        %595 = vmatpush.xpose.msra.mxu0 0.0
        %596 = vmatpush.xpose.msra.mxu0 0.0
        %597 = vmatpush.xpose.msra.mxu0 0.0
        %598 = vmatpush.xpose.msra.mxu0 0.0
        %599 = vmatpush.xpose.msra.mxu0 0.0
        %600 = vmatpush.xpose.msra.mxu0 0.0
        %601 = vmatpush.xpose.msra.mxu0 0.0
        %602 = vmatpush.xpose.msra.mxu0 0.0
        %603 = vmatpush.xpose.msra.mxu0 0.0
        %604 = vmatpush.xpose.msra.mxu0 0.0
        %605 = vmatpush.xpose.msra.mxu0 0.0
        %606 = vmatpush.xpose.msra.mxu0 0.0
        %607 = vmatpush.xpose.msra.mxu0 0.0
        %608 = vmatpush.xpose.msra.mxu0 %v591
        %609 = vmatmul.f32.gmra.mxu0 %v589
        %v610 = vpop.f32.mrf.mxu0
        %v611 = vadd.f32 0.0, %v610
        %612 = vdwg.mxu0
        %v613 = vsel %vm317, %v611, -inf
        %614 = vmax.xlane.f32.xlu0 %v613
        %v615 = vpop.xlane.xlu0 %614
        %v616 = vsub.f32 %v611, %v615
        %v617 = vmul.f32 %v616, 1.442695
        %v618 = vpow.pop %v617
        %v619 = vsel %vm317, %v618, 0.0
        %620 = vadd.xlane.f32.xlu0 %v619
        %v621 = vpop.xlane.xlu0 %620
        %622 = vrot.lane.b32.xlu0 %v306, 40
        %v623 = vpop.permute.xlu0 %622
        %v626 = vsel %vm317, %v618, 0
        %628 = vmatpush.msra.mxu0 0.0
        %629 = vmatpush.msra.mxu0 0.0
        %630 = vmatpush.msra.mxu0 0.0
        %631 = vmatpush.msra.mxu0 0.0
        %632 = vmatpush.msra.mxu0 0.0
        %633 = vmatpush.msra.mxu0 0.0
        %634 = vmatpush.msra.mxu0 0.0
        %635 = vmatpush.msra.mxu0 0.0
        %636 = vmatpush.msra.mxu0 0.0
        %637 = vmatpush.msra.mxu0 0.0
        %638 = vmatpush.msra.mxu0 0.0
        %639 = vmatpush.msra.mxu0 0.0
        %640 = vmatpush.msra.mxu0 0.0
        %641 = vmatpush.msra.mxu0 0.0
        %642 = vmatpush.msra.mxu0 0.0
        %643 = vmatpush.msra.mxu0 %v623
        %644 = vmatmul.f32.gmra.mxu0 %v626
        %v645 = vpop.f32.mrf.mxu0
        %v646 = vadd.f32 0.0, %v645
        %647 = vdwg.mxu0
        %v648 = vrcp.pop %v621
        %v649 = vmul.f32 %v646, %v648
        %v651 = vsel %vm317, %v649, 0
        %653 = vmatpush.msra.mxu0 0.0
        %654 = vmatpush.msra.mxu0 0.0
        %655 = vmatpush.msra.mxu0 0.0
        %656 = vmatpush.msra.mxu0 0.0
        %657 = vmatpush.msra.mxu0 0.0
        %658 = vmatpush.msra.mxu0 0.0
        %659 = vmatpush.msra.mxu0 0.0
        %660 = vmatpush.msra.mxu0 0.0
        %661 = vmatpush.msra.mxu0 0.0
        %662 = vmatpush.msra.mxu0 0.0
        %663 = vmatpush.msra.mxu0 0.0
        %664 = vmatpush.msra.mxu0 0.0
        %665 = vmatpush.msra.mxu0 0.0
        %666 = vmatpush.msra.mxu0 0.0
        %667 = vmatpush.msra.mxu0 0.0
        %668 = vmatpush.msra.mxu0 %v312
        %669 = vmatmul.f32.gmra.mxu0 %v651
        %v670 = vpop.f32.mrf.mxu0
        %v671 = vadd.f32 0.0, %v670
        %672 = vdwg.mxu0
        %v673 = vadd.f32 %v584, %v671
        %674 = vst.msk [vmem:[%s274] sm:$0xff] %vm284, %v673
        %s675 = sand.u32 %s141, 1
        %s676 = scalar_lea.sflag [#allocation4], %s675
        %s677 = sand.u32 %s141, 1
        %s678 = smul.addr %s677, 8
        %s679 = scalar_lea.vmem [#allocation8], %s678
        // Predicated region
        $region53: #{general_attn_forward.1} parent=39 // pred_check
          %p680 = pneg %p151
        $region54: #{general_attn_forward.1} parent=39 // pred_check_branch
          %682 = sbr.rel (%p680) target = $region56
        $region55: #{general_attn_forward.1} parent=39 // pred_region
          %684 = vsyncadd %s676, 0
          %s685 = smul.addr %s23, 8
          %s686 = scalar_lea.hbm %s5, %s685
          %s688 = sshll.u32 %s679, 4
          %s689 = int_to_ptr.vmem [resolvable:$true] %s688
          %s690 = sshll.u32 %s686, 4
          %s691 = int_to_ptr.hbm [resolvable:$true] %s690
          %693 = dma.vmem_to_hbm [thread:$0]  %s689, 128, %s691, %s676
        $region56: #{general_attn_forward.1} parent=39 // pred_fallthru
          _
      $region40: #{general_attn_forward.1} parent=5 // pred_fallthru
        _
      %p694 = scmp.le.s32.totalorder 2, %s18
      // Predicated region
      $region57: #{general_attn_forward.1} parent=5 // pred_check
        %p695 = pneg %p694
      $region58: #{general_attn_forward.1} parent=5 // pred_check_branch
        %697 = sbr.rel (%p695) target = $region60
      $region59: #{general_attn_forward.1} parent=5 // pred_region
        %s698 = ssub.s32 %s18, 2
        // Predicated region
        $region61: #{general_attn_forward.1} parent=59 // pred_check
          %p699 = pneg %p157
        $region62: #{general_attn_forward.1} parent=59 // pred_check_branch
          %701 = sbr.rel (%p699) target = $region64
        $region63: #{general_attn_forward.1} parent=59 // pred_region
          %s702 = sand.u32 %s142, 1
          %s703 = scalar_lea.sflag [#allocation4], %s702
          %s704 = sand.u32 %s142, 1
          %s705 = smul.addr %s704, 8
          %s706 = scalar_lea.vmem [#allocation8], %s705
          %708 = dma.done %s703, 128
        $region64: #{general_attn_forward.1} parent=59 // pred_fallthru
          _
      $region60: #{general_attn_forward.1} parent=5 // pred_fallthru
        _
    $region6: #{general_attn_forward.1} parent=1 // loop_footer
      %s22 = sadd.s32 1, %s18
    $region7: #{general_attn_forward.1} parent=1 // loop_footer_branch
      %17 = sbr.rel target = $region3
    $region8: #{general_attn_forward.1} parent=1 // loop_exit
      _
    %709 = vsyncpa [#allocation3], 1
    %s710 = scalar_lea.sflag [#allocation3], 1
    %711 = vsyncpa %s710, 1
    %712 = vsyncpa [#allocation6], 1
    %713 = vsyncpa [#allocation4], 1
    %s714 = scalar_lea.sflag [#allocation4], 1
    %715 = vsyncpa %s714, 1

</llo_original>
